<compile_context>
chip_gen: v5e
topology: v5e:2x2
jax: 0.10.0
libtpu: 0.0.40
codegen_flags: <defaults>
</compile_context>

<pallas_src>
import functools

import jax
import jax.numpy as jnp
from jax.experimental import pallas as pl
from jax.experimental.pallas import tpu as pltpu

LANES = 128
SUBLANES = 8


def _num_tensorcores():
    """2 TensorCores per chip on v7x; 1 on v5e/v6e (and as a safe fallback)."""
    try:
        kind = jax.devices()[0].device_kind.lower()
    except Exception:
        return 1
    return 2 if "v7" in kind else 1


def _sublane_multiple(*dtypes):
    """Row-block multiple so sub-32-bit inputs keep full sublane packing."""
    m = SUBLANES
    for dt in dtypes:
        itemsize = max(1, jnp.dtype(dt).itemsize)
        m = max(m, SUBLANES * max(1, 4 // itemsize))
    return m


def _bbce_kernel(rows, block_rows, steps, needs_mask,
                 pred_ref, gt_ref, pos_ref, a_ref, b_ref):
    """Streaming elementwise BCE terms + running per-core (8,128) partial sums.

    grid = (core, step); each core accumulates into its own resident output block:
      pos += gt                      (valid elements only)
      a   += (1-gt)*x + softplus(-x) (pos_weight-independent part)
      b   += gt * softplus(-x)       (scaled by (ratio-1) in the wrapper finalize)
    The balanced-loss finalize (ratio / w_neg / mean) is done in the JAX wrapper.
    """
    c = pl.program_id(0)
    i = pl.program_id(1)

    @pl.when(i == 0)
    def _():
        pos_ref[...] = jnp.zeros_like(pos_ref)
        a_ref[...] = jnp.zeros_like(a_ref)
        b_ref[...] = jnp.zeros_like(b_ref)

    x = pred_ref[...].astype(jnp.float32)
    z = gt_ref[...].astype(jnp.float32)

    def tile_sum(v):
        # (block_rows, 128) -> (8, 128): adds across vregs only (pure VPU,
        # no cross-lane XLU work on the per-tile path).
        return v.reshape(-1, SUBLANES, LANES).sum(axis=0)

    def accumulate(mask):
        nx = -x
        # Stable softplus(-x): -|x| = min(x, -x); relu(-x) = max(-x, 0).
        sp = jnp.log1p(jnp.exp(jnp.minimum(x, nx))) + jnp.maximum(nx, 0.0)
        a = (1.0 - z) * x + sp
        b = z * sp
        zz = z
        if mask is not None:
            # jnp.where (select) also discards NaN/Inf from stale/clamped rows;
            # do NOT replace with multiplication by the mask (NaN*0 = NaN).
            a = jnp.where(mask, a, 0.0)
            b = jnp.where(mask, b, 0.0)
            zz = jnp.where(mask, z, 0.0)
        pos_ref[0] += tile_sum(zz)
        a_ref[0] += tile_sum(a)
        b_ref[0] += tile_sum(b)

    if needs_mask:
        block_start = (c * steps + i) * block_rows
        is_full = block_start + block_rows <= rows

        @pl.when(is_full)
        def _():
            accumulate(None)

        @pl.when(jnp.logical_not(is_full))
        def _():
            r = jax.lax.broadcasted_iota(jnp.int32, (block_rows, LANES), 0)
            accumulate(block_start + r < rows)
    else:
        accumulate(None)


def bbce_with_logit_loss(pred, gt, block_rows=4096, num_cores=None):
    """Pallas implementation of BBCEWithLogitLoss.forward(pred, gt) -> scalar."""
    assert pred.shape == gt.shape
    n = int(pred.size)
    pred_f = pred.reshape(-1)
    gt_f = gt.reshape(-1)

    align = SUBLANES * LANES            # 1024-element (8,128) tile
    n_bulk = (n // align) * align
    n_tail = n - n_bulk

    if num_cores is None:
        num_cores = _num_tensorcores()

    s_pos = jnp.float32(0.0)
    s_a = jnp.float32(0.0)
    s_b = jnp.float32(0.0)

    if n_bulk > 0:
        if n_tail > 0:
            # No whole-array pad: only the 1024-aligned bulk is sliced/reshaped.
            # TODO(synk): a fully copy-free path would pass the raw flat array with
            # memory_space=pl.ANY and DMA tiles manually.
            pred_bulk = pred_f[:n_bulk]
            gt_bulk = gt_f[:n_bulk]
        else:
            pred_bulk = pred_f
            gt_bulk = gt_f

        rows = n_bulk // LANES          # multiple of 8
        mult = _sublane_multiple(pred.dtype, gt.dtype)
        if rows < mult:
            br = rows                   # full-extent block (still a multiple of 8)
        else:
            br = max(mult, (min(block_rows, rows) // mult) * mult)

        steps = pl.cdiv(rows, num_cores * br)
        covered = num_cores * steps * br
        needs_mask = covered != rows
        last_block = pl.cdiv(rows, br) - 1

        def in_map(c, i):
            # Clamp so fully-out-of-range blocks (small inputs on 2 cores) stay
            # in-bounds; their contributions are zeroed by the in-kernel mask.
            return (jnp.minimum(c * steps + i, last_block), 0)

        def out_map(c, i):
            return (c, 0, 0)            # constant over the step axis -> accumulator

        tile = pl.BlockSpec((br, LANES), in_map)
        acc_spec = pl.BlockSpec((1, SUBLANES, LANES), out_map)
        acc_shape = jax.ShapeDtypeStruct((num_cores, SUBLANES, LANES), jnp.float32)

        pos_p, a_p, b_p = pl.pallas_call(
            functools.partial(_bbce_kernel, rows, br, steps, needs_mask),
            out_shape=(acc_shape, acc_shape, acc_shape),
            grid_spec=pltpu.PrefetchScalarGridSpec(
                num_scalar_prefetch=0,
                grid=(num_cores, steps),
                in_specs=[tile, tile],
                out_specs=(acc_spec, acc_spec, acc_spec),
            ),
            compiler_params=pltpu.CompilerParams(
                dimension_semantics=("parallel", "arbitrary"),
                vmem_limit_bytes=32 * 1024 * 1024),
        )(pred_bulk.reshape(rows, LANES), gt_bulk.reshape(rows, LANES))

        s_pos = jnp.sum(pos_p)
        s_a = jnp.sum(a_p)
        s_b = jnp.sum(b_p)

    if n_tail > 0:
        # Sub-1024-element tail reduced in plain JAX (negligible vs the bulk DMA).
        xt = pred_f[n_bulk:].astype(jnp.float32)
        zt = gt_f[n_bulk:].astype(jnp.float32)
        spt = jnp.log1p(jnp.exp(-jnp.abs(xt))) + jnp.maximum(-xt, 0.0)
        s_pos = s_pos + jnp.sum(zt)
        s_a = s_a + jnp.sum((1.0 - zt) * xt + spt)
        s_b = s_b + jnp.sum(zt * spt)

    # Balanced-loss finalize (~10 flops) in the wrapper.
    # Note: n_f is inexact for n > 2^24; within f32 noise of the reference.
    eps = 1e-10
    n_f = jnp.float32(n)
    count_pos = s_pos + eps
    count_neg = n_f - s_pos             # sum(1-gt) == n - sum(gt)
    ratio = count_neg / count_pos
    w_neg = count_pos / (count_pos + count_neg)
    return w_neg * (s_a + (ratio - 1.0) * s_b) / n_f


def _ref_loss(pred, gt):
    """Pure-JAX reference (mirrors the PyTorch module)."""
    eps = 1e-10
    pred = pred.astype(jnp.float32)
    gt = gt.astype(jnp.float32)
    count_pos = jnp.sum(gt) + eps
    count_neg = jnp.sum(1.0 - gt)
    ratio = count_neg / count_pos
    w_neg = count_pos / (count_pos + count_neg)
    sp = jnp.log1p(jnp.exp(-jnp.abs(pred))) + jnp.maximum(-pred, 0.0)
    per_elem = (1.0 - gt) * pred + (1.0 + (ratio - 1.0) * gt) * sp
    return w_neg * jnp.mean(per_elem)


if __name__ == "__main__":
    key = jax.random.PRNGKey(0)
    k1, k2, k3, k4 = jax.random.split(key, 4)

    # Primary test: segmentation-style NCHW logits (1024-aligned bulk only).
    shape = (2, 4, 16, 16)
    pred = jax.random.normal(k1, shape, dtype=jnp.float32)
    gt = (jax.random.uniform(k2, shape) > 0.5).astype(jnp.float32)

    loss = bbce_with_logit_loss(pred, gt)
    jax.block_until_ready(loss)
    ref = _ref_loss(pred, gt)
    assert jnp.allclose(loss, ref, rtol=1e-5, atol=1e-6), (loss, ref)

    # Multi-step accumulation path (small block_rows override).
    loss_ms = bbce_with_logit_loss(pred, gt, block_rows=8)
    jax.block_until_ready(loss_ms)
    assert jnp.allclose(loss_ms, ref, rtol=1e-5, atol=1e-6), (loss_ms, ref)

    # Unaligned shape: aligned bulk through the kernel + plain-JAX tail (no pad).
    shape2 = (1, 3, 20, 20)
    pred2 = jax.random.normal(k3, shape2, dtype=jnp.float32)
    gt2 = (jax.random.uniform(k4, shape2) > 0.5).astype(jnp.float32)
    loss2 = bbce_with_logit_loss(pred2, gt2, block_rows=8)
    jax.block_until_ready(loss2)
    ref2 = _ref_loss(pred2, gt2)
    assert jnp.allclose(loss2, ref2, rtol=1e-5, atol=1e-6), (loss2, ref2)

    # bf16 logits streamed as-is (cast to f32 inside the kernel, halves DMA bytes).
    pred_bf = pred.astype(jnp.bfloat16)
    loss_bf = bbce_with_logit_loss(pred_bf, gt)
    jax.block_until_ready(loss_bf)
    ref_bf = _ref_loss(pred_bf, gt)
    assert jnp.allclose(loss_bf, ref_bf, rtol=1e-5, atol=1e-6), (loss_bf, ref_bf)

    print("KERNEL_OK")
</pallas_src>

<mosaic_0001>
module attributes {stable_mosaic.version = 11 : i64} {
  func.func @_bbce_kernel(%arg0: i32, %arg1: i32, %arg2: memref<16x128xf32, #tpu.memory_space<vmem>>, %arg3: memref<16x128xf32, #tpu.memory_space<vmem>>, %arg4: memref<1x8x128xf32, #tpu.memory_space<vmem>>, %arg5: memref<1x8x128xf32, #tpu.memory_space<vmem>>, %arg6: memref<1x8x128xf32, #tpu.memory_space<vmem>>) attributes {dimension_semantics = [#tpu.dimension_semantics<parallel>, #tpu.dimension_semantics<arbitrary>], iteration_bounds = array<i64: 1, 1>, scalar_prefetch = 0 : i64, scratch_operands = 0 : i64, tpu.core_type = #tpu.core_type<tc>, window_params = [{transform_indices = @transform_0, window_bounds = array<i64: 16, 128>}, {transform_indices = @transform_1, window_bounds = array<i64: 16, 128>}, {transform_indices = @transform_2, window_bounds = array<i64: 1, 8, 128>}, {transform_indices = @transform_3, window_bounds = array<i64: 1, 8, 128>}, {transform_indices = @transform_4, window_bounds = array<i64: 1, 8, 128>}]} {
    %c0_i32 = arith.constant 0 : i32
    %0 = arith.cmpi eq, %arg1, %c0_i32 : i32
    %1 = arith.extui %0 : i1 to i32
    %c0_i32_0 = arith.constant 0 : i32
    %2 = arith.cmpi ne, %1, %c0_i32_0 : i32
    scf.if %2 {
      %cst_27 = arith.constant 0.000000e+00 : f32
      %42 = vector.broadcast %cst_27 : f32 to vector<1x8x128xf32>
      %c0_28 = arith.constant 0 : index
      %c0_29 = arith.constant 0 : index
      %c0_30 = arith.constant 0 : index
      %43 = vector.load %arg4[%c0_28, %c0_29, %c0_30] : memref<1x8x128xf32, #tpu.memory_space<vmem>>, vector<1x8x128xf32>
      tpu.vector_store %arg4[%c0_28, %c0_29, %c0_30], %42 {strides = array<i32>} : memref<1x8x128xf32, #tpu.memory_space<vmem>>, vector<1x8x128xf32>,
      %cst_31 = arith.constant 0.000000e+00 : f32
      %44 = vector.broadcast %cst_31 : f32 to vector<1x8x128xf32>
      %c0_32 = arith.constant 0 : index
      %c0_33 = arith.constant 0 : index
      %c0_34 = arith.constant 0 : index
      %45 = vector.load %arg5[%c0_32, %c0_33, %c0_34] : memref<1x8x128xf32, #tpu.memory_space<vmem>>, vector<1x8x128xf32>
      tpu.vector_store %arg5[%c0_32, %c0_33, %c0_34], %44 {strides = array<i32>} : memref<1x8x128xf32, #tpu.memory_space<vmem>>, vector<1x8x128xf32>,
      %cst_35 = arith.constant 0.000000e+00 : f32
      %46 = vector.broadcast %cst_35 : f32 to vector<1x8x128xf32>
      %c0_36 = arith.constant 0 : index
      %c0_37 = arith.constant 0 : index
      %c0_38 = arith.constant 0 : index
      %47 = vector.load %arg6[%c0_36, %c0_37, %c0_38] : memref<1x8x128xf32, #tpu.memory_space<vmem>>, vector<1x8x128xf32>
      tpu.vector_store %arg6[%c0_36, %c0_37, %c0_38], %46 {strides = array<i32>} : memref<1x8x128xf32, #tpu.memory_space<vmem>>, vector<1x8x128xf32>,
    } else {
    }
    %c0 = arith.constant 0 : index
    %c0_1 = arith.constant 0 : index
    %3 = vector.load %arg2[%c0, %c0_1] : memref<16x128xf32, #tpu.memory_space<vmem>>, vector<16x128xf32>
    %c0_2 = arith.constant 0 : index
    %c0_3 = arith.constant 0 : index
    %4 = vector.load %arg3[%c0_2, %c0_3] : memref<16x128xf32, #tpu.memory_space<vmem>>, vector<16x128xf32>
    %cst = arith.constant 0.000000e+00 : f32
    %5 = vector.broadcast %cst : f32 to vector<16x128xf32>
    %6 = arith.subf %5, %3 : vector<16x128xf32>
    %7 = arith.minimumf %3, %6 : vector<16x128xf32>
    %8 = math.exp %7 : vector<16x128xf32>
    %9 = math.log1p %8 : vector<16x128xf32>
    %cst_4 = arith.constant 0.000000e+00 : f32
    %10 = vector.broadcast %cst_4 : f32 to vector<16x128xf32>
    %11 = arith.maximumf %6, %10 : vector<16x128xf32>
    %12 = arith.addf %9, %11 : vector<16x128xf32>
    %cst_5 = arith.constant 1.000000e+00 : f32
    %13 = vector.broadcast %cst_5 : f32 to vector<16x128xf32>
    %14 = arith.subf %13, %4 : vector<16x128xf32>
    %15 = arith.mulf %14, %3 : vector<16x128xf32>
    %16 = arith.addf %15, %12 : vector<16x128xf32>
    %17 = arith.mulf %4, %12 : vector<16x128xf32>
    %c0_6 = arith.constant 0 : index
    %c0_7 = arith.constant 0 : index
    %c0_8 = arith.constant 0 : index
    %18 = vector.load %arg4[%c0_6, %c0_7, %c0_8] : memref<1x8x128xf32, #tpu.memory_space<vmem>>, vector<1x8x128xf32>
    %19 = vector.shape_cast %18 : vector<1x8x128xf32> to vector<8x128xf32>
    %20 = vector.shape_cast %4 : vector<16x128xf32> to vector<2x8x128xf32>
    %cst_9 = arith.constant dense<0.000000e+00> : vector<8x128xf32>
    %21 = vector.multi_reduction <add>, %20, %cst_9 [0] : vector<2x8x128xf32> to vector<8x128xf32>
    %22 = arith.addf %19, %21 : vector<8x128xf32>
    %c0_10 = arith.constant 0 : index
    %c0_11 = arith.constant 0 : index
    %c0_12 = arith.constant 0 : index
    %23 = vector.load %arg4[%c0_10, %c0_11, %c0_12] : memref<1x8x128xf32, #tpu.memory_space<vmem>>, vector<1x8x128xf32>
    %24 = vector.shape_cast %23 : vector<1x8x128xf32> to vector<8x128xf32>
    %25 = vector.shape_cast %22 : vector<8x128xf32> to vector<1x8x128xf32>
    tpu.vector_store %arg4[%c0_10, %c0_11, %c0_12], %25 {strides = array<i32>} : memref<1x8x128xf32, #tpu.memory_space<vmem>>, vector<1x8x128xf32>,
    %c0_13 = arith.constant 0 : index
    %c0_14 = arith.constant 0 : index
    %c0_15 = arith.constant 0 : index
    %26 = vector.load %arg5[%c0_13, %c0_14, %c0_15] : memref<1x8x128xf32, #tpu.memory_space<vmem>>, vector<1x8x128xf32>
    %27 = vector.shape_cast %26 : vector<1x8x128xf32> to vector<8x128xf32>
    %28 = vector.shape_cast %16 : vector<16x128xf32> to vector<2x8x128xf32>
    %cst_16 = arith.constant dense<0.000000e+00> : vector<8x128xf32>
    %29 = vector.multi_reduction <add>, %28, %cst_16 [0] : vector<2x8x128xf32> to vector<8x128xf32>
    %30 = arith.addf %27, %29 : vector<8x128xf32>
    %c0_17 = arith.constant 0 : index
    %c0_18 = arith.constant 0 : index
    %c0_19 = arith.constant 0 : index
    %31 = vector.load %arg5[%c0_17, %c0_18, %c0_19] : memref<1x8x128xf32, #tpu.memory_space<vmem>>, vector<1x8x128xf32>
    %32 = vector.shape_cast %31 : vector<1x8x128xf32> to vector<8x128xf32>
    %33 = vector.shape_cast %30 : vector<8x128xf32> to vector<1x8x128xf32>
    tpu.vector_store %arg5[%c0_17, %c0_18, %c0_19], %33 {strides = array<i32>} : memref<1x8x128xf32, #tpu.memory_space<vmem>>, vector<1x8x128xf32>,
    %c0_20 = arith.constant 0 : index
    %c0_21 = arith.constant 0 : index
    %c0_22 = arith.constant 0 : index
    %34 = vector.load %arg6[%c0_20, %c0_21, %c0_22] : memref<1x8x128xf32, #tpu.memory_space<vmem>>, vector<1x8x128xf32>
    %35 = vector.shape_cast %34 : vector<1x8x128xf32> to vector<8x128xf32>
    %36 = vector.shape_cast %17 : vector<16x128xf32> to vector<2x8x128xf32>
    %cst_23 = arith.constant dense<0.000000e+00> : vector<8x128xf32>
    %37 = vector.multi_reduction <add>, %36, %cst_23 [0] : vector<2x8x128xf32> to vector<8x128xf32>
    %38 = arith.addf %35, %37 : vector<8x128xf32>
    %c0_24 = arith.constant 0 : index
    %c0_25 = arith.constant 0 : index
    %c0_26 = arith.constant 0 : index
    %39 = vector.load %arg6[%c0_24, %c0_25, %c0_26] : memref<1x8x128xf32, #tpu.memory_space<vmem>>, vector<1x8x128xf32>
    %40 = vector.shape_cast %39 : vector<1x8x128xf32> to vector<8x128xf32>
    %41 = vector.shape_cast %38 : vector<8x128xf32> to vector<1x8x128xf32>
    tpu.vector_store %arg6[%c0_24, %c0_25, %c0_26], %41 {strides = array<i32>} : memref<1x8x128xf32, #tpu.memory_space<vmem>>, vector<1x8x128xf32>,
    return
  }
  func.func @transform_0(%arg0: i32, %arg1: i32) -> (i32, i32) {
    %c1_i32 = arith.constant 1 : i32
    %0 = arith.muli %arg0, %c1_i32 : i32
    %1 = arith.addi %0, %arg1 : i32
    %c0_i32 = arith.constant 0 : i32
    %2 = arith.minsi %1, %c0_i32 : i32
    %c0_i32_0 = arith.constant 0 : i32
    %c0_i32_1 = arith.constant 0 : i32
    return %2, %c0_i32_0 : i32, i32
  }
  func.func @transform_1(%arg0: i32, %arg1: i32) -> (i32, i32) {
    %c1_i32 = arith.constant 1 : i32
    %0 = arith.muli %arg0, %c1_i32 : i32
    %1 = arith.addi %0, %arg1 : i32
    %c0_i32 = arith.constant 0 : i32
    %2 = arith.minsi %1, %c0_i32 : i32
    %c0_i32_0 = arith.constant 0 : i32
    %c0_i32_1 = arith.constant 0 : i32
    return %2, %c0_i32_0 : i32, i32
  }
  func.func @transform_2(%arg0: i32, %arg1: i32) -> (i32, i32, i32) {
    %c0_i32 = arith.constant 0 : i32
    %c0_i32_0 = arith.constant 0 : i32
    %c0_i32_1 = arith.constant 0 : i32
    return %arg0, %c0_i32, %c0_i32_0 : i32, i32, i32
  }
  func.func @transform_3(%arg0: i32, %arg1: i32) -> (i32, i32, i32) {
    %c0_i32 = arith.constant 0 : i32
    %c0_i32_0 = arith.constant 0 : i32
    %c0_i32_1 = arith.constant 0 : i32
    return %arg0, %c0_i32, %c0_i32_0 : i32, i32, i32
  }
  func.func @transform_4(%arg0: i32, %arg1: i32) -> (i32, i32, i32) {
    %c0_i32 = arith.constant 0 : i32
    %c0_i32_0 = arith.constant 0 : i32
    %c0_i32_1 = arith.constant 0 : i32
    return %arg0, %c0_i32, %c0_i32_0 : i32, i32, i32
  }
}

</mosaic_0001>

<llo_original>
// kernel: tpu_custom_call.1
$region0: #{tpu_custom_call.1}
  #allocation0 [shape = 'u32[]', space=smem, size = 0x4, offset = 0x4, fixed_abs, tag = 'smem constant byte address 0x4 - core index']
  #allocation1 [shape = 'u32[72,128]{1,0:T(1,128)}', space=vmem, size = 0x9000, scoped, tag = 'internal scratch']
  %s0 = inlined_call_operand.hbm [shape: f32[16,128], index: 0, kind: input, shape index: {}]
  %s1 = inlined_call_operand.hbm [shape: f32[16,128], index: 1, kind: input, shape index: {}]
  %s2 = inlined_call_operand.hbm [shape: f32[1,8,128], index: 2, kind: output, shape index: {0}]
  %s3 = inlined_call_operand.hbm [shape: f32[1,8,128], index: 3, kind: output, shape index: {1}]
  %s4 = inlined_call_operand.hbm [shape: f32[1,8,128], index: 4, kind: output, shape index: {2}]
  %5 = xla_tuple %s2, %s3, %s4
  %s6 = sld [smem:[#allocation0]]
  $region46: #{tpu_custom_call.1} parent=0
    _
  %s8 = ssub.s32 1, %s6
  %s9 = scalar_select 0, %s8, %s6
  $region1: #{tpu_custom_call.1} parent=0
    #allocation2 [shape = 'u8[8192]{0}', space=vmem, size = 0x2000, scoped, tag = 'input window, operand 0, single buffered']
    #allocation3 [shape = 's32[1]{0}', space=sflag, size = 0x4, scoped, tag = 'scoped memory for tpu_custom_call.1']
    #allocation4 [shape = 's32[1]{0}', space=sflag, size = 0x4, scoped, tag = 'scoped memory for tpu_custom_call.1']
    #allocation5 [shape = 'u8[8192]{0}', space=vmem, size = 0x2000, scoped, tag = 'input window, operand 1, single buffered']
    #allocation6 [shape = 's32[1]{0}', space=sflag, size = 0x4, scoped, tag = 'scoped memory for tpu_custom_call.1']
    #allocation7 [shape = 'u8[4096]{0}', space=vmem, size = 0x1000, scoped, tag = 'output window, operand 0, single buffered']
    #allocation8 [shape = 'u8[4096]{0}', space=vmem, size = 0x1000, scoped, tag = 'output window, operand 1, single buffered']
    #allocation9 [shape = 's32[1]{0}', space=sflag, size = 0x4, scoped, tag = 'scoped memory for tpu_custom_call.1']
    #allocation10 [shape = 'u8[4096]{0}', space=vmem, size = 0x1000, scoped, tag = 'output window, operand 2, single buffered']
    %10 = vsyncpa [#allocation3], 0
    %11 = vsyncpa [#allocation6], 0
    %12 = vsyncpa [#allocation4], 0
    %13 = vsyncpa [#allocation9], 0
    // Predicated region
    $region2: #{tpu_custom_call.1} parent=1 // pred_check
      _
    $region3: #{tpu_custom_call.1} parent=1 // pred_check_branch
      %15 = sbr.rel (0) target = $region5
    $region4: #{tpu_custom_call.1} parent=1 // pred_region
      %s16 = sadd.s32 0, 0
      %p17 = scmp.lt.s32.totalorder %s16, 0
      %s18 = scalar_select %p17, %s16, 0
      %s19 = smul.u32 2, %s18
      %21 = vsyncadd [#allocation3], 0
      %s22 = smul.addr %s19, 8
      %s23 = scalar_lea.hbm %s0, %s22
      %s24 = sshll.u32 %s23, 4
      %s25 = int_to_ptr.hbm [resolvable:$true] %s24
      %s26 = sshll.u32 [#allocation2], 4
      %s27 = int_to_ptr.vmem [resolvable:$true] %s26
      %32 = dma.hbm_to_vmem [thread:$0]  %s25, 256, %s27, [#allocation3], 128, 128, 8
    $region5: #{tpu_custom_call.1} parent=1 // pred_fallthru
      _
    // Predicated region
    $region6: #{tpu_custom_call.1} parent=1 // pred_check
      _
    $region7: #{tpu_custom_call.1} parent=1 // pred_check_branch
      %34 = sbr.rel (0) target = $region9
    $region8: #{tpu_custom_call.1} parent=1 // pred_region
      %s35 = sadd.s32 0, 0
      %p36 = scmp.lt.s32.totalorder %s35, 0
      %s37 = scalar_select %p36, %s35, 0
      %s38 = smul.u32 2, %s37
      %40 = vsyncadd [#allocation6], 0
      %s41 = smul.addr %s38, 8
      %s42 = scalar_lea.hbm %s1, %s41
      %s43 = sshll.u32 %s42, 4
      %s44 = int_to_ptr.hbm [resolvable:$true] %s43
      %s45 = sshll.u32 [#allocation5], 4
      %s46 = int_to_ptr.vmem [resolvable:$true] %s45
      %51 = dma.hbm_to_vmem [thread:$0]  %s44, 256, %s46, [#allocation6], 128, 128, 8
    $region9: #{tpu_custom_call.1} parent=1 // pred_fallthru
      _
    // Predicated region
    $region10: #{tpu_custom_call.1} parent=1 // pred_check
      _
    $region11: #{tpu_custom_call.1} parent=1 // pred_check_branch
      %53 = sbr.rel (0) target = $region13
    $region12: #{tpu_custom_call.1} parent=1 // pred_region
      %55 = dma.done [#allocation3], 256
    $region13: #{tpu_custom_call.1} parent=1 // pred_fallthru
      _
    // Predicated region
    $region14: #{tpu_custom_call.1} parent=1 // pred_check
      _
    $region15: #{tpu_custom_call.1} parent=1 // pred_check_branch
      %57 = sbr.rel (0) target = $region17
    $region16: #{tpu_custom_call.1} parent=1 // pred_region
      %59 = dma.done [#allocation6], 256
    $region17: #{tpu_custom_call.1} parent=1 // pred_fallthru
      _
    %s60 = sadd.s32 0, 0
    %p61 = scmp.lt.s32.totalorder %s60, 0
    %s62 = scalar_select %p61, %s60, 0
    %s63 = smul.u32 2, %s62
    %s64 = sadd.s32 0, 0
    %p65 = scmp.lt.s32.totalorder %s64, 0
    %s66 = scalar_select %p65, %s64, 0
    %s67 = smul.u32 2, %s66
    %p68 = scmp.eq.s32.totalorder 0, 0
    // Predicated region
    $region18: #{tpu_custom_call.1} parent=1 // pred_check
      %p69 = pneg %p68
    $region19: #{tpu_custom_call.1} parent=1 // pred_check_branch
      %71 = sbr.rel (%p69) target = $region21
    $region20: #{tpu_custom_call.1} parent=1 // pred_region
      %72 = vst [vmem:[#allocation7] sm:$0xff] 0.0
      %73 = vst [vmem:[#allocation8] sm:$0xff] 0.0
      %74 = vst [vmem:[#allocation10] sm:$0xff] 0.0
    $region21: #{tpu_custom_call.1} parent=1 // pred_fallthru
      _
    %v75 = vld [vmem:[#allocation2] sm:$0xff]
    %v76 = vld [vmem:[#allocation2 + $0x8] sm:$0xff]
    %v77 = vld [vmem:[#allocation5] sm:$0xff]
    %v78 = vld [vmem:[#allocation5 + $0x8] sm:$0xff]
    %v79 = vsub.f32 0.0, %v75
    %v80 = vsub.f32 0.0, %v76
    %v81 = vmin.f32 %v75, %v79
    %v82 = vmin.f32 %v76, %v80
    %v83 = vmul.f32 %v81, 1.442695
    %v84 = vpow.pop %v83
    %v85 = vmul.f32 %v82, 1.442695
    %v86 = vpow.pop %v85
    %v87 = vadd.f32 %v84, 1.0
    %v88 = vlog2.pop %v87
    %v89 = vmul.f32 %v88, 0.6931472
    %v90 = vmul.f32 -0.5, %v84
    %v91 = vadd.f32 %v90, 1.0
    %v92 = vmul.f32 %v91, %v84
    %v93 = vand.u32 2147483647, %v84
    %vm94 = vcmp.lt.f32.partialorder %v93, 0.0004427343
    %v95 = vsel %vm94, %v92, %v89
    %v96 = vadd.f32 %v86, 1.0
    %v97 = vlog2.pop %v96
    %v98 = vmul.f32 %v97, 0.6931472
    %v99 = vmul.f32 -0.5, %v86
    %v100 = vadd.f32 %v99, 1.0
    %v101 = vmul.f32 %v100, %v86
    %v102 = vand.u32 2147483647, %v86
    %vm103 = vcmp.lt.f32.partialorder %v102, 0.0004427343
    %v104 = vsel %vm103, %v101, %v98
    %v105 = vmax.f32 %v79, 0.0
    %v106 = vmax.f32 %v80, 0.0
    %v107 = vadd.f32 %v95, %v105
    %v108 = vadd.f32 %v104, %v106
    %v109 = vsub.f32 1.0, %v77
    %v110 = vsub.f32 1.0, %v78
    %v111 = vmul.f32 %v109, %v75
    %v112 = vmul.f32 %v110, %v76
    %v113 = vadd.f32 %v111, %v107
    %v114 = vadd.f32 %v112, %v108
    %v115 = vmul.f32 %v77, %v107
    %v116 = vmul.f32 %v78, %v108
    %v117 = vld [vmem:[#allocation7] sm:$0xff]
    %v118 = vadd.f32 %v77, %v78
    %v119 = vadd.f32 %v117, %v118
    %120 = vst [vmem:[#allocation7] sm:$0xff] %v119
    %v121 = vld [vmem:[#allocation8] sm:$0xff]
    %v122 = vadd.f32 %v113, %v114
    %v123 = vadd.f32 %v121, %v122
    %124 = vst [vmem:[#allocation8] sm:$0xff] %v123
    %v125 = vld [vmem:[#allocation10] sm:$0xff]
    %v126 = vadd.f32 %v115, %v116
    %v127 = vadd.f32 %v125, %v126
    %128 = vst [vmem:[#allocation10] sm:$0xff] %v127
    // Predicated region
    $region22: #{tpu_custom_call.1} parent=1 // pred_check
      _
    $region23: #{tpu_custom_call.1} parent=1 // pred_check_branch
      %130 = sbr.rel (0) target = $region25
    $region24: #{tpu_custom_call.1} parent=1 // pred_region
      %132 = vsyncadd [#allocation4], 0
      %s134 = sshll.u32 [#allocation7], 4
      %s135 = int_to_ptr.vmem [resolvable:$true] %s134
      %s136 = sshll.u32 %s2, 4
      %s137 = int_to_ptr.hbm [resolvable:$true] %s136
      %139 = dma.vmem_to_hbm [thread:$0]  %s135, 128, %s137, [#allocation4]
    $region25: #{tpu_custom_call.1} parent=1 // pred_fallthru
      _
    // Predicated region
    $region26: #{tpu_custom_call.1} parent=1 // pred_check
      _
    $region27: #{tpu_custom_call.1} parent=1 // pred_check_branch
      %141 = sbr.rel (0) target = $region29
    $region28: #{tpu_custom_call.1} parent=1 // pred_region
      %143 = vsyncadd [#allocation9], 0
      %s145 = sshll.u32 [#allocation8], 4
      %s146 = int_to_ptr.vmem [resolvable:$true] %s145
      %s147 = sshll.u32 %s3, 4
      %s148 = int_to_ptr.hbm [resolvable:$true] %s147
      %150 = dma.vmem_to_hbm [thread:$0]  %s146, 128, %s148, [#allocation9]
    $region29: #{tpu_custom_call.1} parent=1 // pred_fallthru
      _
    // Predicated region
    $region30: #{tpu_custom_call.1} parent=1 // pred_check
      _
    $region31: #{tpu_custom_call.1} parent=1 // pred_check_branch
      %152 = sbr.rel (0) target = $region33
    $region32: #{tpu_custom_call.1} parent=1 // pred_region
      %154 = vsyncadd [#allocation9], 0
      %s156 = sshll.u32 [#allocation10], 4
      %s157 = int_to_ptr.vmem [resolvable:$true] %s156
      %s158 = sshll.u32 %s4, 4
      %s159 = int_to_ptr.hbm [resolvable:$true] %s158
      %161 = dma.vmem_to_hbm [thread:$0]  %s157, 128, %s159, [#allocation9]
    $region33: #{tpu_custom_call.1} parent=1 // pred_fallthru
      _
    // Predicated region
    $region34: #{tpu_custom_call.1} parent=1 // pred_check
      _
    $region35: #{tpu_custom_call.1} parent=1 // pred_check_branch
      %163 = sbr.rel (0) target = $region37
    $region36: #{tpu_custom_call.1} parent=1 // pred_region
      %165 = dma.done [#allocation4], 128
    $region37: #{tpu_custom_call.1} parent=1 // pred_fallthru
      _
    // Predicated region
    $region38: #{tpu_custom_call.1} parent=1 // pred_check
      _
    $region39: #{tpu_custom_call.1} parent=1 // pred_check_branch
      %167 = sbr.rel (0) target = $region41
    $region40: #{tpu_custom_call.1} parent=1 // pred_region
      %169 = dma.done [#allocation9], 128
    $region41: #{tpu_custom_call.1} parent=1 // pred_fallthru
      _
    // Predicated region
    $region42: #{tpu_custom_call.1} parent=1 // pred_check
      _
    $region43: #{tpu_custom_call.1} parent=1 // pred_check_branch
      %171 = sbr.rel (0) target = $region45
    $region44: #{tpu_custom_call.1} parent=1 // pred_region
      %173 = dma.done [#allocation9], 128
    $region45: #{tpu_custom_call.1} parent=1 // pred_fallthru
      _
    %174 = vsyncpa [#allocation3], 1
    %175 = vsyncpa [#allocation6], 1
    %176 = vsyncpa [#allocation4], 1
    %177 = vsyncpa [#allocation9], 1

</llo_original>
